<compile_context>
chip_gen: v7x
topology: tpu7x:2x2x1
jax: 0.10.0
libtpu: 0.0.40
codegen_flags: <defaults>
</compile_context>

<pallas_src>
import jax
import jax.numpy as jnp
from jax.experimental import pallas as pl
from jax.experimental.pallas import tpu as pltpu

_SUBLANE = 8


def _round_up(n, m):
    return (n + m - 1) // m * m


def _mlp_kernel(x_ref, w1_ref, b1_ref, w2_ref, b2_ref, o_ref):
    # h = relu(x @ W1 + b1): MXU matmul with f32 accumulation, epilogue on the
    # f32 VPU path (v5e has no bf16 VPU).
    h = jnp.dot(x_ref[...], w1_ref[...], preferred_element_type=jnp.float32)
    h = jnp.maximum(h + b1_ref[...], 0.0)
    # y = h @ W2 + b2  (h downcast to the weight dtype feeds the MXU; with
    # f32 weights this is a no-op).
    y = jnp.dot(h.astype(w2_ref.dtype), w2_ref[...],
                preferred_element_type=jnp.float32)
    o_ref[...] = (y + b2_ref[...]).astype(o_ref.dtype)


def prepare_params(w1, b1, w2, b2, *, param_dtype=jnp.float32):
    """One-time parameter prep (hoisted out of the per-call forward).

    w1: (D0, D1) (already transposed vs torch's (out,in)), b1: (D1,)/(1,D1),
    w2: (D1, D2), b2: (D2,)/(1,D2).  Weights cast to `param_dtype`
    (use jnp.bfloat16 for the bandwidth-bound throughput path); biases stay
    f32 because the epilogue runs in f32.
    """
    w1 = jnp.asarray(w1, param_dtype)
    w2 = jnp.asarray(w2, param_dtype)
    b1 = jnp.asarray(b1, jnp.float32).reshape(1, -1)
    b2 = jnp.asarray(b2, jnp.float32).reshape(1, -1)
    return w1, b1, w2, b2


def custom_model_forward(x, params, *, target_block_b=2048,
                         out_dtype=jnp.float32, min_grid_steps=2,
                         latency_vmem_budget=16 * 1024 * 1024):
    """Fused forward of Linear(D0,D1) -> ReLU -> Linear(D1,D2).

    x: (B, D0).  Returns (B, D2) in `out_dtype`.
    """
    w1, b1, w2, b2 = params
    B, D0 = x.shape
    D0w, D1 = w1.shape
    D1w, D2 = w2.shape
    assert D0 == D0w and D1 == D1w

    x = x.astype(w1.dtype)
    in_size = jnp.dtype(w1.dtype).itemsize
    out_size = jnp.dtype(out_dtype).itemsize
    bp = _round_up(B, _SUBLANE)

    # Rough whole-problem VMEM footprint for the gridless path:
    # operands + f32 hidden activations + output.
    latency_bytes = ((bp * D0 + D0 * D1 + D1 * D2) * in_size
                     + (D1 + D2 + bp * D1) * 4
                     + bp * D2 * out_size)

    if bp <= target_block_b and latency_bytes <= latency_vmem_budget:
        # Latency path: gridless, every operand whole in VMEM.  No pad and no
        # slice when B is already a multiple of 8 (the common case), so the
        # call is a single kernel launch.
        xp = x if bp == B else jnp.pad(x, ((0, bp - B), (0, 0)))
        out_p = pl.pallas_call(
            _mlp_kernel,
            out_shape=jax.ShapeDtypeStruct((bp, D2), out_dtype),
            in_specs=[pl.BlockSpec(memory_space=pltpu.MemorySpace.VMEM)] * 5,
            out_specs=pl.BlockSpec(memory_space=pltpu.MemorySpace.VMEM),
        )(xp, w1, b1, w2, b2)
        return out_p if bp == B else out_p[:B]

    # Throughput path: tile the batch; weights/biases are pinned (same block
    # every step).  Keep >= min_grid_steps so v7x's two TensorCores both get
    # work via the "parallel" batch axis, and derive block_b from the batch so
    # at most one combined sublane+block pad of x is emitted.
    n_steps = max(min_grid_steps, pl.cdiv(bp, target_block_b))
    block_b = _round_up(pl.cdiv(bp, n_steps), _SUBLANE)
    bpg = block_b * n_steps
    xp = x if bpg == B else jnp.pad(x, ((0, bpg - B), (0, 0)))

    out_p = pl.pallas_call(
        _mlp_kernel,
        out_shape=jax.ShapeDtypeStruct((bpg, D2), out_dtype),
        grid_spec=pltpu.PrefetchScalarGridSpec(
            num_scalar_prefetch=0,
            grid=(n_steps,),
            in_specs=[
                pl.BlockSpec((block_b, D0), lambda i: (i, 0)),
                pl.BlockSpec((D0, D1), lambda i: (0, 0)),
                pl.BlockSpec((1, D1), lambda i: (0, 0)),
                pl.BlockSpec((D1, D2), lambda i: (0, 0)),
                pl.BlockSpec((1, D2), lambda i: (0, 0)),
            ],
            out_specs=pl.BlockSpec((block_b, D2), lambda i: (i, 0)),
        ),
        # No vmem_limit_bytes: actual usage (double-buffered x/out tiles +
        # tiny pinned weights) is ~1-2 MiB, far below the scoped default on
        # v5e/v6e/v7x; a fixed constant would only risk becoming a ceiling.
        compiler_params=pltpu.CompilerParams(
            dimension_semantics=("parallel",),
        ),
    )(xp, w1, b1, w2, b2)
    return out_p if bpg == B else out_p[:B]


def _torch_linear_init(key, fan_in, fan_out):
    """Deterministic init mimicking torch.nn.Linear defaults. Returns (W_T, b)
    with W_T shaped (fan_in, fan_out) and b shaped (1, fan_out)."""
    kw, kb = jax.random.split(key)
    bound_w = (1.0 / fan_in) ** 0.5 * (3.0 ** 0.5)   # kaiming_uniform(a=sqrt(5))
    w = jax.random.uniform(kw, (fan_in, fan_out), jnp.float32,
                           minval=-bound_w, maxval=bound_w)
    bound_b = (1.0 / fan_in) ** 0.5
    b = jax.random.uniform(kb, (1, fan_out), jnp.float32,
                           minval=-bound_b, maxval=bound_b)
    return w, b


if __name__ == "__main__":
    key = jax.random.PRNGKey(0)
    k_x, k_l1, k_l2 = jax.random.split(key, 3)

    B, D0, D1, D2 = 8, 32, 64, 16

    x = jax.random.normal(k_x, (B, D0), jnp.float32)
    w1, b1 = _torch_linear_init(k_l1, D0, D1)
    w2, b2 = _torch_linear_init(k_l2, D1, D2)

    # One-time parameter prep (hoisted out of the per-call hot path).
    params = prepare_params(w1, b1, w2, b2)

    def ref_fn(a):
        return jnp.maximum(a @ w1 + b1, 0.0) @ w2 + b2

    # Small-batch (gridless, latency) path: single kernel launch, no pad/slice.
    out = jax.block_until_ready(custom_model_forward(x, params))
    assert out.shape == (B, D2)
    assert jnp.allclose(out, ref_fn(x), atol=1e-5, rtol=1e-5)

    # Batch-tiled (grid, throughput) path: pinned weights, parallel batch axis,
    # block_b derived so the 1024-row batch splits into 4 x 256 with no pad.
    B_big = 1024
    x_big = jax.random.normal(k_x, (B_big, D0), jnp.float32)
    out_big = jax.block_until_ready(
        custom_model_forward(x_big, params, target_block_b=256))
    assert out_big.shape == (B_big, D2)
    assert jnp.allclose(out_big, ref_fn(x_big), atol=1e-4, rtol=1e-4)

    # Non-multiple-of-8 batch exercises the single combined pad + final slice.
    x_odd = jax.random.normal(k_x, (13, D0), jnp.float32)
    out_odd = jax.block_until_ready(custom_model_forward(x_odd, params))
    assert out_odd.shape == (13, D2)
    assert jnp.allclose(out_odd, ref_fn(x_odd), atol=1e-5, rtol=1e-5)

    print("KERNEL_OK")
</pallas_src>

<mosaic_0001>
module attributes {stable_mosaic.version = 11 : i64} {
  func.func @_mlp_kernel(%arg0: memref<8x32xf32, #tpu.memory_space<vmem>>, %arg1: memref<32x64xf32, #tpu.memory_space<vmem>>, %arg2: memref<1x64xf32, #tpu.memory_space<vmem>>, %arg3: memref<64x16xf32, #tpu.memory_space<vmem>>, %arg4: memref<1x16xf32, #tpu.memory_space<vmem>>, %arg5: memref<8x16xf32, #tpu.memory_space<vmem>>) attributes {dimension_semantics = [], scalar_prefetch = 0 : i64, scratch_operands = 0 : i64, tpu.core_type = #tpu.core_type<tc>} {
    %c0 = arith.constant 0 : index
    %c0_0 = arith.constant 0 : index
    %0 = vector.load %arg0[%c0, %c0_0] : memref<8x32xf32, #tpu.memory_space<vmem>>, vector<8x32xf32>
    %c0_1 = arith.constant 0 : index
    %c0_2 = arith.constant 0 : index
    %1 = vector.load %arg1[%c0_1, %c0_2] : memref<32x64xf32, #tpu.memory_space<vmem>>, vector<32x64xf32>
    %cst = arith.constant dense<0.000000e+00> : vector<8x64xf32>
    %2 = tpu.matmul %0, %1, %cst {dimension_numbers = #tpu.dot_dimension_numbers<[1], [0], [0], [1], [0, 0, 1, 1], [], []>} : vector<8x32xf32>, vector<32x64xf32>, vector<8x64xf32> -> vector<8x64xf32>
    %c0_3 = arith.constant 0 : index
    %c0_4 = arith.constant 0 : index
    %3 = vector.load %arg2[%c0_3, %c0_4] : memref<1x64xf32, #tpu.memory_space<vmem>>, vector<1x64xf32>
    %4 = vector.broadcast %3 : vector<1x64xf32> to vector<8x64xf32>
    %5 = arith.addf %2, %4 : vector<8x64xf32>
    %cst_5 = arith.constant 0.000000e+00 : f32
    %6 = vector.broadcast %cst_5 : f32 to vector<8x64xf32>
    %7 = arith.maximumf %5, %6 : vector<8x64xf32>
    %c0_6 = arith.constant 0 : index
    %c0_7 = arith.constant 0 : index
    %8 = vector.load %arg3[%c0_6, %c0_7] : memref<64x16xf32, #tpu.memory_space<vmem>>, vector<64x16xf32>
    %cst_8 = arith.constant dense<0.000000e+00> : vector<8x16xf32>
    %9 = tpu.matmul %7, %8, %cst_8 {dimension_numbers = #tpu.dot_dimension_numbers<[1], [0], [0], [1], [0, 0, 1, 1], [], []>} : vector<8x64xf32>, vector<64x16xf32>, vector<8x16xf32> -> vector<8x16xf32>
    %c0_9 = arith.constant 0 : index
    %c0_10 = arith.constant 0 : index
    %10 = vector.load %arg4[%c0_9, %c0_10] : memref<1x16xf32, #tpu.memory_space<vmem>>, vector<1x16xf32>
    %11 = vector.broadcast %10 : vector<1x16xf32> to vector<8x16xf32>
    %12 = arith.addf %9, %11 : vector<8x16xf32>
    %c0_11 = arith.constant 0 : index
    %c0_12 = arith.constant 0 : index
    %13 = vector.load %arg5[%c0_11, %c0_12] : memref<8x16xf32, #tpu.memory_space<vmem>>, vector<8x16xf32>
    tpu.vector_store %arg5[%c0_11, %c0_12], %12 {strides = array<i32>} : memref<8x16xf32, #tpu.memory_space<vmem>>, vector<8x16xf32>,
    return
  }
}

</mosaic_0001>

<llo_original>
// kernel: tpu_custom_call.1
$region0: #{tpu_custom_call.1}
  #allocation0 [shape = 'u32[]', space=smem, size = 0x4, offset = 0x4, fixed_abs, tag = 'smem constant byte address 0x4 - core index']
  #allocation1 [shape = 'u32[144,128]{1,0:T(1,128)}', space=vmem, size = 0x12000, scoped, tag = 'internal scratch']
  %s0 = inlined_call_operand.vmem [shape: f32[8,32], index: 0, kind: input, shape index: {}]
  %s1 = inlined_call_operand.vmem [shape: f32[32,64], index: 1, kind: input, shape index: {}]
  %s2 = inlined_call_operand.vmem [shape: f32[1,64], index: 2, kind: input, shape index: {}]
  %s3 = inlined_call_operand.vmem [shape: f32[64,16], index: 3, kind: input, shape index: {}]
  %s4 = inlined_call_operand.vmem [shape: f32[1,16], index: 4, kind: input, shape index: {}]
  %s5 = inlined_call_operand.hbm [shape: f32[8,16], index: 5, kind: output, shape index: {}]
  %s6 = sld [smem:[#allocation0]]
  $region30: #{tpu_custom_call.1} parent=0
    _
  %s8 = ssub.s32 1, %s6
  %s9 = scalar_select 0, %s8, %s6
  $region1: #{tpu_custom_call.1} parent=0
    #allocation2 [shape = 'u8[4096]{0}', space=vmem, size = 0x1000, scoped, tag = 'output window, operand 0, single buffered']
    #allocation3 [shape = 's32[1]{0}', space=sflag, size = 0x4, scoped, tag = 'scoped memory for tpu_custom_call.1']
    %10 = vsyncpa [#allocation3], 0
    // Predicated region
    $region2: #{tpu_custom_call.1} parent=1 // pred_check
      _
    $region3: #{tpu_custom_call.1} parent=1 // pred_check_branch
      %12 = sbr.rel (0) target = $region5
    $region4: #{tpu_custom_call.1} parent=1 // pred_region
      _
    $region5: #{tpu_custom_call.1} parent=1 // pred_fallthru
      _
    // Predicated region
    $region6: #{tpu_custom_call.1} parent=1 // pred_check
      _
    $region7: #{tpu_custom_call.1} parent=1 // pred_check_branch
      %14 = sbr.rel (0) target = $region9
    $region8: #{tpu_custom_call.1} parent=1 // pred_region
      _
    $region9: #{tpu_custom_call.1} parent=1 // pred_fallthru
      _
    // Predicated region
    $region10: #{tpu_custom_call.1} parent=1 // pred_check
      _
    $region11: #{tpu_custom_call.1} parent=1 // pred_check_branch
      %16 = sbr.rel (0) target = $region13
    $region12: #{tpu_custom_call.1} parent=1 // pred_region
      _
    $region13: #{tpu_custom_call.1} parent=1 // pred_fallthru
      _
    // Predicated region
    $region14: #{tpu_custom_call.1} parent=1 // pred_check
      _
    $region15: #{tpu_custom_call.1} parent=1 // pred_check_branch
      %18 = sbr.rel (0) target = $region17
    $region16: #{tpu_custom_call.1} parent=1 // pred_region
      _
    $region17: #{tpu_custom_call.1} parent=1 // pred_fallthru
      _
    // Predicated region
    $region18: #{tpu_custom_call.1} parent=1 // pred_check
      _
    $region19: #{tpu_custom_call.1} parent=1 // pred_check_branch
      %20 = sbr.rel (0) target = $region21
    $region20: #{tpu_custom_call.1} parent=1 // pred_region
      _
    $region21: #{tpu_custom_call.1} parent=1 // pred_fallthru
      _
    %v21 = vld [vmem:[%s0] sm:$0xff]
    %v22 = vld [vmem:[%s1] sm:$0xff]
    %v23 = vld [vmem:[%s1 + $0x8] sm:$0xff]
    %v24 = vld [vmem:[%s1 + $0x10] sm:$0xff]
    %v25 = vld [vmem:[%s1 + $0x18] sm:$0xff]
    %v26 = vld [vmem:[%s2] sm:$0x1]
    %v28 = vlaneseq
    %v29 = vshrl.u32 %v28, 7
    %v30 = vsub.s32 0, %v29
    %v31 = vrot.slane %v26, %v30
    %vm33 = vcmask 261120
    %v35 = vsel %vm33, %v21, 0
    %37 = vmatprep.subr.mxu0 0.0
    %38 = vmatpush1.msra.mxu0 %v22
    %39 = vmatprep.subr.mxu0 0.0
    %40 = vmatpush1.msra.mxu0 %v23
    %41 = vmatprep.subr.mxu0 0.0
    %42 = vmatpush1.msra.mxu0 %v24
    %43 = vmatprep.subr.mxu0 0.0
    %44 = vmatpush1.msra.mxu0 %v25
    %45 = vmatprep.subr.mxu0 0.0
    %46 = vmatpush1.msra.mxu0 0.0
    %47 = vmatprep.subr.mxu0 0.0
    %48 = vmatpush1.msra.mxu0 0.0
    %49 = vmatprep.subr.mxu0 0.0
    %50 = vmatpush1.msra.mxu0 0.0
    %51 = vmatprep.subr.mxu0 0.0
    %52 = vmatpush1.msra.mxu0 0.0
    %53 = vmatprep.subr.mxu0 0.0
    %54 = vmatpush1.msra.mxu0 0.0
    %55 = vmatprep.subr.mxu0 0.0
    %56 = vmatpush1.msra.mxu0 0.0
    %57 = vmatprep.subr.mxu0 0.0
    %58 = vmatpush1.msra.mxu0 0.0
    %59 = vmatprep.subr.mxu0 0.0
    %60 = vmatpush1.msra.mxu0 0.0
    %61 = vmatprep.subr.mxu0 0.0
    %62 = vmatpush1.msra.mxu0 0.0
    %63 = vmatprep.subr.mxu0 0.0
    %64 = vmatpush1.msra.mxu0 0.0
    %65 = vmatprep.subr.mxu0 0.0
    %66 = vmatpush1.msra.mxu0 0.0
    %67 = vmatprep.subr.mxu0 0.0
    %68 = vmatpush1.msra.mxu0 0.0
    %69 = vmatprep.subr.mxu0 0.0
    %70 = vmatpush1.msra.mxu0 0.0
    %71 = vmatprep.subr.mxu0 0.0
    %72 = vmatpush1.msra.mxu0 0.0
    %73 = vmatprep.subr.mxu0 0.0
    %74 = vmatpush1.msra.mxu0 0.0
    %75 = vmatprep.subr.mxu0 0.0
    %76 = vmatpush1.msra.mxu0 0.0
    %77 = vmatprep.subr.mxu0 0.0
    %78 = vmatpush1.msra.mxu0 0.0
    %79 = vmatprep.subr.mxu0 0.0
    %80 = vmatpush1.msra.mxu0 0.0
    %81 = vmatprep.subr.mxu0 0.0
    %82 = vmatpush1.msra.mxu0 0.0
    %83 = vmatprep.subr.mxu0 0.0
    %84 = vmatpush1.msra.mxu0 0.0
    %85 = vmatprep.subr.mxu0 0.0
    %86 = vmatpush1.msra.mxu0 0.0
    %87 = vmatprep.subr.mxu0 0.0
    %88 = vmatpush1.msra.mxu0 0.0
    %89 = vmatprep.subr.mxu0 0.0
    %90 = vmatpush1.msra.mxu0 0.0
    %91 = vmatprep.subr.mxu0 0.0
    %92 = vmatpush1.msra.mxu0 0.0
    %93 = vmatprep.subr.mxu0 0.0
    %94 = vmatpush1.msra.mxu0 0.0
    %95 = vmatprep.subr.mxu0 0.0
    %96 = vmatpush1.msra.mxu0 0.0
    %97 = vmatprep.subr.mxu0 0.0
    %98 = vmatpush1.msra.mxu0 0.0
    %99 = vmatprep.subr.mxu0 0.0
    %100 = vmatpush1.msra.mxu0 0.0
    %101 = vmatprep.mubr.f32.mxu0 0.0
    %102 = vmatmul.mubr.f32.gmra.mrb[0].mxu0 %v35
    %v103 = vpop.f32.mrb[0].mxu0
    %v104 = vadd.f32 %v31, %v103
    %v105 = vpop.f32.mrb[0].mxu0
    %106 = vdwg.mxu0
    %v107 = vmax.f32 %v104, 0.0
    %v108 = vld [vmem:[%s3] sm:$0xff]
    %v109 = vld [vmem:[%s3 + $0x8] sm:$0xff]
    %v110 = vld [vmem:[%s3 + $0x10] sm:$0xff]
    %v111 = vld [vmem:[%s3 + $0x18] sm:$0xff]
    %v112 = vld [vmem:[%s3 + $0x20] sm:$0xff]
    %v113 = vld [vmem:[%s3 + $0x28] sm:$0xff]
    %v114 = vld [vmem:[%s3 + $0x30] sm:$0xff]
    %v115 = vld [vmem:[%s3 + $0x38] sm:$0xff]
    %v116 = vld [vmem:[%s4] sm:$0x1]
    %v118 = vlaneseq
    %v119 = vshrl.u32 %v118, 7
    %v120 = vsub.s32 0, %v119
    %v121 = vrot.slane %v116, %v120
    %vm123 = vcmask 523264
    %v125 = vsel %vm123, %v107, 0
    %127 = vmatprep.subr.mxu0 0.0
    %128 = vmatpush1.msra.mxu0 %v108
    %129 = vmatprep.subr.mxu0 0.0
    %130 = vmatpush1.msra.mxu0 %v109
    %131 = vmatprep.subr.mxu0 0.0
    %132 = vmatpush1.msra.mxu0 %v110
    %133 = vmatprep.subr.mxu0 0.0
    %134 = vmatpush1.msra.mxu0 %v111
    %135 = vmatprep.subr.mxu0 0.0
    %136 = vmatpush1.msra.mxu0 %v112
    %137 = vmatprep.subr.mxu0 0.0
    %138 = vmatpush1.msra.mxu0 %v113
    %139 = vmatprep.subr.mxu0 0.0
    %140 = vmatpush1.msra.mxu0 %v114
    %141 = vmatprep.subr.mxu0 0.0
    %142 = vmatpush1.msra.mxu0 %v115
    %143 = vmatprep.subr.mxu0 0.0
    %144 = vmatpush1.msra.mxu0 0.0
    %145 = vmatprep.subr.mxu0 0.0
    %146 = vmatpush1.msra.mxu0 0.0
    %147 = vmatprep.subr.mxu0 0.0
    %148 = vmatpush1.msra.mxu0 0.0
    %149 = vmatprep.subr.mxu0 0.0
    %150 = vmatpush1.msra.mxu0 0.0
    %151 = vmatprep.subr.mxu0 0.0
    %152 = vmatpush1.msra.mxu0 0.0
    %153 = vmatprep.subr.mxu0 0.0
    %154 = vmatpush1.msra.mxu0 0.0
    %155 = vmatprep.subr.mxu0 0.0
    %156 = vmatpush1.msra.mxu0 0.0
    %157 = vmatprep.subr.mxu0 0.0
    %158 = vmatpush1.msra.mxu0 0.0
    %159 = vmatprep.subr.mxu0 0.0
    %160 = vmatpush1.msra.mxu0 0.0
    %161 = vmatprep.subr.mxu0 0.0
    %162 = vmatpush1.msra.mxu0 0.0
    %163 = vmatprep.subr.mxu0 0.0
    %164 = vmatpush1.msra.mxu0 0.0
    %165 = vmatprep.subr.mxu0 0.0
    %166 = vmatpush1.msra.mxu0 0.0
    %167 = vmatprep.subr.mxu0 0.0
    %168 = vmatpush1.msra.mxu0 0.0
    %169 = vmatprep.subr.mxu0 0.0
    %170 = vmatpush1.msra.mxu0 0.0
    %171 = vmatprep.subr.mxu0 0.0
    %172 = vmatpush1.msra.mxu0 0.0
    %173 = vmatprep.subr.mxu0 0.0
    %174 = vmatpush1.msra.mxu0 0.0
    %175 = vmatprep.subr.mxu0 0.0
    %176 = vmatpush1.msra.mxu0 0.0
    %177 = vmatprep.subr.mxu0 0.0
    %178 = vmatpush1.msra.mxu0 0.0
    %179 = vmatprep.subr.mxu0 0.0
    %180 = vmatpush1.msra.mxu0 0.0
    %181 = vmatprep.subr.mxu0 0.0
    %182 = vmatpush1.msra.mxu0 0.0
    %183 = vmatprep.subr.mxu0 0.0
    %184 = vmatpush1.msra.mxu0 0.0
    %185 = vmatprep.subr.mxu0 0.0
    %186 = vmatpush1.msra.mxu0 0.0
    %187 = vmatprep.subr.mxu0 0.0
    %188 = vmatpush1.msra.mxu0 0.0
    %189 = vmatprep.subr.mxu0 0.0
    %190 = vmatpush1.msra.mxu0 0.0
    %191 = vmatprep.mubr.f32.mxu0 0.0
    %192 = vmatmul.mubr.f32.gmra.mrb[0].mxu0 %v125
    %v193 = vpop.f32.mrb[0].mxu0
    %v194 = vadd.f32 %v121, %v193
    %v195 = vpop.f32.mrb[0].mxu0
    %196 = vdwg.mxu0
    %vm197 = vcmask 130048
    %198 = vst.msk [vmem:[#allocation2] sm:$0xff] %vm197, %v194
    // Predicated region
    $region22: #{tpu_custom_call.1} parent=1 // pred_check
      _
    $region23: #{tpu_custom_call.1} parent=1 // pred_check_branch
      %200 = sbr.rel (0) target = $region25
    $region24: #{tpu_custom_call.1} parent=1 // pred_region
      %s202 = ssub.s32 128, 128
      %203 = vsyncadd [#allocation3], %s202
      %s205 = sshll.u32 [#allocation2], 4
      %s206 = int_to_ptr.vmem [resolvable:$true] %s205
      %208 = dma.vmem_to_hbm [thread:$0]  %s206, 128, %s5, [#allocation3]
    $region25: #{tpu_custom_call.1} parent=1 // pred_fallthru
      _
    // Predicated region
    $region26: #{tpu_custom_call.1} parent=1 // pred_check
      _
    $region27: #{tpu_custom_call.1} parent=1 // pred_check_branch
      %210 = sbr.rel (0) target = $region29
    $region28: #{tpu_custom_call.1} parent=1 // pred_region
      %211 = dma.done [#allocation3], 128
    $region29: #{tpu_custom_call.1} parent=1 // pred_fallthru
      _
    %212 = vsyncpa [#allocation3], 1

</llo_original>
